<compile_context>
chip_gen: v7x
topology: tpu7x:2x2x1
jax: 0.10.0
libtpu: 0.0.40
codegen_flags: <defaults>
</compile_context>

<pallas_src>
import numpy as np
import jax
import jax.numpy as jnp
from jax.experimental import pallas as pl
from jax.experimental.pallas import tpu as pltpu


_INV_SQRT2 = 0.7071067811865476


def _haar_pair(n):
    """(lo, hi) analysis matrices with +-1 entries, shape (n, n//2)."""
    m = n // 2
    lo = np.zeros((n, m), dtype=np.float32)
    hi = np.zeros((n, m), dtype=np.float32)
    for k in range(m):
        lo[2 * k, k] = 1.0
        lo[2 * k + 1, k] = 1.0
        hi[2 * k, k] = 1.0
        hi[2 * k + 1, k] = -1.0
    return lo, hi


def _build_spatial_matrix(H, W):
    """(H*W, 4*H2*W2) Kronecker Haar analysis matrix.

    Column blocks ordered [LL | LH | HL | HH] over (h, w). The two spatial
    1/sqrt(2) factors AND the temporal 1/sqrt(2) are folded in, so entries
    are {0, +-0.5/sqrt(2)} and the kernel's temporal butterfly needs no scale.
    """
    h_lo, h_hi = _haar_pair(H)
    w_lo, w_hi = _haar_pair(W)
    mhw = np.concatenate(
        [np.kron(h_lo, w_lo), np.kron(h_lo, w_hi),
         np.kron(h_hi, w_lo), np.kron(h_hi, w_hi)], axis=1)
    mhw *= 0.5 * _INV_SQRT2
    return jnp.asarray(mhw, dtype=jnp.float32)


def _vmem_limit_bytes():
    """Generation-aware scoped-VMEM cap (bytes)."""
    phys = 64 * 1024 * 1024            # conservative default (v7x has 64 MiB)
    try:
        phys = int(pltpu.get_tpu_info().vmem_capacity_bytes)
    except Exception:
        pass
    # ~16 MiB headroom for the compiler; never ask for more than ~100 MiB.
    return int(min(max(phys - (16 << 20), 32 << 20), 100 << 20))


def _pick_bm(B, C, T, H, W, vmem_budget_bytes):
    """Largest channel-block BM (divisor of C) whose double-buffered blocks fit
    the per-generation VMEM budget, with layout-legal sublane extent
    ((BM*T2) % 8 == 0 or BM == C). When B == 1, BM is capped at C//2 so a
    dual-TensorCore part still gets >=2 parallel grid steps."""
    T2 = T // 2
    HW = H * W
    H2W2 = (H // 2) * (W // 2)
    lane_pad = ((H2W2 + 127) // 128) * 128     # out block pads to 128 lanes
    itemsize = 4

    max_bm = C
    if B == 1 and C > 1:
        max_bm = max(1, C // 2)

    candidates = []
    for bm in range(1, max_bm + 1):
        if C % bm:
            continue
        if bm != C and (bm * T2) % 8 != 0:
            continue
        candidates.append(bm)
    if not candidates:
        candidates = [C]                       # full extent is always legal

    def footprint(bm):
        in_b = bm * T * HW * itemsize                      # (BM*T2, 2*HW)
        out_b = 8 * bm * T2 * lane_pad * itemsize          # lane-padded out
        scratch = 2 * in_b                                  # lo_t/hi_t/lo/hi
        return 2 * (in_b + out_b) + scratch                 # double-buffered

    fitting = [bm for bm in candidates if footprint(bm) <= vmem_budget_bytes]
    return max(fitting) if fitting else min(candidates)


def _make_dwt3d_kernel(HW, H2W2):
    def kernel(x_ref, mhw_ref, o_ref):
        # x_ref  : (1, BM*T2, 2*HW)   row = [frame 2k | frame 2k+1], c major
        # mhw_ref: (HW, 4*H2W2)       resident spatial+temporal Haar matrix
        # o_ref  : (1, 8, BM*T2, H2W2) subband-major output block
        x = x_ref[0]                          # (BM*T2, 2*HW)
        xe = x[:, :HW]                        # aligned lane slice (t even)
        xo = x[:, HW:]                        # aligned lane slice (t odd)
        lo_t = xe + xo                        # 1/sqrt(2) folded into mhw
        hi_t = xe - xo

        mhw = mhw_ref[...]
        # Spatial (h, w) Haar: one wide MXU matmul per temporal branch,
        # N = 4*H2W2 lanes = [LL | LH | HL | HH].
        lo = jnp.dot(lo_t, mhw, preferred_element_type=jnp.float32)
        hi = jnp.dot(hi_t, mhw, preferred_element_type=jnp.float32)

        # Emit subband-major layout directly (f = 4*ft + 2*fh + fw).
        for k in range(4):
            sl = slice(k * H2W2, (k + 1) * H2W2)
            o_ref[0, k, :, :] = lo[:, sl]
            o_ref[0, 4 + k, :, :] = hi[:, sl]

    return kernel


def wavelet_encoding(x, block_channels=None):
    """DWT3D(wave='db1', dim='thw'): (B, C, T, H, W) -> (B, 8*C, T/2, H/2, W/2)."""
    B, C, T, H, W = x.shape
    assert T % 2 == 0 and H % 2 == 0 and W % 2 == 0
    T2, H2, W2 = T // 2, H // 2, W // 2
    HW, H2W2 = H * W, H2 * W2
    itemsize = 4

    x = x.astype(jnp.float32)
    mhw = _build_spatial_matrix(H, W)
    mhw_bytes = HW * (4 * H2W2) * itemsize

    vmem_limit = _vmem_limit_bytes()
    # Budget for the pipelined in/out blocks: total cap minus the (possibly
    # double-buffered) constant matrix and some headroom.
    block_budget = max(vmem_limit - 2 * mhw_bytes - (2 << 20), 0)

    BM = (block_channels if block_channels is not None
          else _pick_bm(B, C, T, H, W, block_budget))
    assert C % BM == 0

    # Free (bitcast) reshape: NCDHW row-major -> (B, C*T2, 2*HW); each row
    # holds the temporally-paired frames contiguously along the lane axis.
    x2 = x.reshape(B, C * T2, 2 * HW)

    grid = (B, C // BM)                       # both axes independent -> parallel
    in_block = (1, BM * T2, 2 * HW)
    out_block = (1, 8, BM * T2, H2W2)

    flops = int(2 * (B * C * T) * HW * (4 * H2W2) + 2 * B * C * T2 * HW)
    bytes_accessed = int((B * C * T * HW + B * 8 * C * T2 * H2W2) * itemsize
                         + mhw_bytes)
    cost = pl.CostEstimate(flops=flops, transcendentals=0,
                           bytes_accessed=bytes_accessed)

    grid_spec = pltpu.PrefetchScalarGridSpec(
        num_scalar_prefetch=0,
        grid=grid,
        in_specs=[
            pl.BlockSpec(in_block, lambda b, j: (b, j, 0)),
            # constant index_map -> the spatial matrix is DMA'd once and stays
            # resident in VMEM across the whole grid.
            pl.BlockSpec((HW, 4 * H2W2), lambda b, j: (0, 0)),
        ],
        out_specs=pl.BlockSpec(out_block, lambda b, j: (b, 0, j, 0)),
    )

    out_raw = pl.pallas_call(
        _make_dwt3d_kernel(HW, H2W2),
        out_shape=jax.ShapeDtypeStruct((B, 8, C * T2, H2W2), jnp.float32),
        grid_spec=grid_spec,
        compiler_params=pltpu.CompilerParams(
            dimension_semantics=("parallel", "parallel"),
            vmem_limit_bytes=vmem_limit),
        cost_estimate=cost,
    )(x2, mhw)

    # (B, 8, C*T2, H2*W2) is already in the final element order, so this is a
    # free bitcast reshape (no transpose / no extra HBM pass).
    return out_raw.reshape(B, 8 * C, T2, H2, W2)


def wavelet_encoding_ref(x):
    """Pure-JAX reference for the same Haar 3D DWT / channel ordering."""
    s = 1.0 / np.sqrt(2.0)

    def split(a, axis):
        ev = jnp.take(a, jnp.arange(0, a.shape[axis], 2), axis=axis)
        od = jnp.take(a, jnp.arange(1, a.shape[axis], 2), axis=axis)
        return (ev + od) * s, (ev - od) * s

    lt, ht = split(x, 2)
    subbands = []
    for xt in (lt, ht):
        lh, hh = split(xt, 3)
        for xh in (lh, hh):
            lw, hw = split(xh, 4)
            for xw in (lw, hw):
                subbands.append(xw)
    return jnp.concatenate(subbands, axis=1)


if __name__ == "__main__":
    key = jax.random.PRNGKey(0)
    B, C, T, H, W = 2, 4, 8, 16, 16
    x = jax.random.normal(key, (B, C, T, H, W), dtype=jnp.float32)

    y = wavelet_encoding(x)
    y = jax.block_until_ready(y)

    assert y.shape == (B, 8 * C, T // 2, H // 2, W // 2), y.shape
    y_ref = wavelet_encoding_ref(x)
    np.testing.assert_allclose(np.asarray(y), np.asarray(y_ref), rtol=1e-5, atol=1e-5)

    print("KERNEL_OK")
</pallas_src>

<mosaic_0001>
module attributes {stable_mosaic.version = 11 : i64} {
  func.func @kernel(%arg0: i32, %arg1: i32, %arg2: memref<1x16x512xf32, #tpu.memory_space<vmem>>, %arg3: memref<256x256xf32, #tpu.memory_space<vmem>>, %arg4: memref<1x8x16x64xf32, #tpu.memory_space<vmem>>) attributes {dimension_semantics = [#tpu.dimension_semantics<parallel>, #tpu.dimension_semantics<parallel>], iteration_bounds = array<i64: 2, 1>, scalar_prefetch = 0 : i64, scratch_operands = 0 : i64, tpu.core_type = #tpu.core_type<tc>, window_params = [{transform_indices = @transform_0, window_bounds = array<i64: 1, 16, 512>}, {pipeline_mode = #tpu.pipeline_mode<synchronous>, transform_indices = @transform_1, window_bounds = array<i64: 256, 256>}, {transform_indices = @transform_2, window_bounds = array<i64: 1, 8, 16, 64>}]} {
    %c0 = arith.constant 0 : index
    %c0_0 = arith.constant 0 : index
    %c0_1 = arith.constant 0 : index
    %0 = vector.load %arg2[%c0, %c0_0, %c0_1] : memref<1x16x512xf32, #tpu.memory_space<vmem>>, vector<1x16x512xf32>
    %1 = vector.shape_cast %0 : vector<1x16x512xf32> to vector<16x512xf32>
    %2 = vector.extract_strided_slice %1 {offsets = [0, 0], sizes = [16, 256], strides = [1, 1]} : vector<16x512xf32> to vector<16x256xf32>
    %3 = vector.extract_strided_slice %1 {offsets = [0, 256], sizes = [16, 256], strides = [1, 1]} : vector<16x512xf32> to vector<16x256xf32>
    %4 = arith.addf %2, %3 : vector<16x256xf32>
    %5 = arith.subf %2, %3 : vector<16x256xf32>
    %c0_2 = arith.constant 0 : index
    %c0_3 = arith.constant 0 : index
    %6 = vector.load %arg3[%c0_2, %c0_3] : memref<256x256xf32, #tpu.memory_space<vmem>>, vector<256x256xf32>
    %cst = arith.constant dense<0.000000e+00> : vector<16x256xf32>
    %7 = tpu.matmul %4, %6, %cst {dimension_numbers = #tpu.dot_dimension_numbers<[1], [0], [0], [1], [0, 0, 1, 1], [], []>} : vector<16x256xf32>, vector<256x256xf32>, vector<16x256xf32> -> vector<16x256xf32>
    %cst_4 = arith.constant dense<0.000000e+00> : vector<16x256xf32>
    %8 = tpu.matmul %5, %6, %cst_4 {dimension_numbers = #tpu.dot_dimension_numbers<[1], [0], [0], [1], [0, 0, 1, 1], [], []>} : vector<16x256xf32>, vector<256x256xf32>, vector<16x256xf32> -> vector<16x256xf32>
    %9 = vector.extract_strided_slice %7 {offsets = [0, 0], sizes = [16, 64], strides = [1, 1]} : vector<16x256xf32> to vector<16x64xf32>
    %c0_5 = arith.constant 0 : index
    %c0_6 = arith.constant 0 : index
    %c0_7 = arith.constant 0 : index
    %c0_8 = arith.constant 0 : index
    %10 = vector.load %arg4[%c0_5, %c0_6, %c0_7, %c0_8] : memref<1x8x16x64xf32, #tpu.memory_space<vmem>>, vector<1x1x16x64xf32>
    %11 = vector.shape_cast %10 : vector<1x1x16x64xf32> to vector<16x64xf32>
    %12 = vector.shape_cast %9 : vector<16x64xf32> to vector<1x1x16x64xf32>
    tpu.vector_store %arg4[%c0_5, %c0_6, %c0_7, %c0_8], %12 {strides = array<i32>} : memref<1x8x16x64xf32, #tpu.memory_space<vmem>>, vector<1x1x16x64xf32>,
    %13 = vector.extract_strided_slice %8 {offsets = [0, 0], sizes = [16, 64], strides = [1, 1]} : vector<16x256xf32> to vector<16x64xf32>
    %c0_9 = arith.constant 0 : index
    %c4 = arith.constant 4 : index
    %c0_10 = arith.constant 0 : index
    %c0_11 = arith.constant 0 : index
    %14 = vector.load %arg4[%c0_9, %c4, %c0_10, %c0_11] : memref<1x8x16x64xf32, #tpu.memory_space<vmem>>, vector<1x1x16x64xf32>
    %15 = vector.shape_cast %14 : vector<1x1x16x64xf32> to vector<16x64xf32>
    %16 = vector.shape_cast %13 : vector<16x64xf32> to vector<1x1x16x64xf32>
    tpu.vector_store %arg4[%c0_9, %c4, %c0_10, %c0_11], %16 {strides = array<i32>} : memref<1x8x16x64xf32, #tpu.memory_space<vmem>>, vector<1x1x16x64xf32>,
    %17 = vector.extract_strided_slice %7 {offsets = [0, 64], sizes = [16, 64], strides = [1, 1]} : vector<16x256xf32> to vector<16x64xf32>
    %c0_12 = arith.constant 0 : index
    %c1 = arith.constant 1 : index
    %c0_13 = arith.constant 0 : index
    %c0_14 = arith.constant 0 : index
    %18 = vector.load %arg4[%c0_12, %c1, %c0_13, %c0_14] : memref<1x8x16x64xf32, #tpu.memory_space<vmem>>, vector<1x1x16x64xf32>
    %19 = vector.shape_cast %18 : vector<1x1x16x64xf32> to vector<16x64xf32>
    %20 = vector.shape_cast %17 : vector<16x64xf32> to vector<1x1x16x64xf32>
    tpu.vector_store %arg4[%c0_12, %c1, %c0_13, %c0_14], %20 {strides = array<i32>} : memref<1x8x16x64xf32, #tpu.memory_space<vmem>>, vector<1x1x16x64xf32>,
    %21 = vector.extract_strided_slice %8 {offsets = [0, 64], sizes = [16, 64], strides = [1, 1]} : vector<16x256xf32> to vector<16x64xf32>
    %c0_15 = arith.constant 0 : index
    %c5 = arith.constant 5 : index
    %c0_16 = arith.constant 0 : index
    %c0_17 = arith.constant 0 : index
    %22 = vector.load %arg4[%c0_15, %c5, %c0_16, %c0_17] : memref<1x8x16x64xf32, #tpu.memory_space<vmem>>, vector<1x1x16x64xf32>
    %23 = vector.shape_cast %22 : vector<1x1x16x64xf32> to vector<16x64xf32>
    %24 = vector.shape_cast %21 : vector<16x64xf32> to vector<1x1x16x64xf32>
    tpu.vector_store %arg4[%c0_15, %c5, %c0_16, %c0_17], %24 {strides = array<i32>} : memref<1x8x16x64xf32, #tpu.memory_space<vmem>>, vector<1x1x16x64xf32>,
    %25 = vector.extract_strided_slice %7 {offsets = [0, 128], sizes = [16, 64], strides = [1, 1]} : vector<16x256xf32> to vector<16x64xf32>
    %c0_18 = arith.constant 0 : index
    %c2 = arith.constant 2 : index
    %c0_19 = arith.constant 0 : index
    %c0_20 = arith.constant 0 : index
    %26 = vector.load %arg4[%c0_18, %c2, %c0_19, %c0_20] : memref<1x8x16x64xf32, #tpu.memory_space<vmem>>, vector<1x1x16x64xf32>
    %27 = vector.shape_cast %26 : vector<1x1x16x64xf32> to vector<16x64xf32>
    %28 = vector.shape_cast %25 : vector<16x64xf32> to vector<1x1x16x64xf32>
    tpu.vector_store %arg4[%c0_18, %c2, %c0_19, %c0_20], %28 {strides = array<i32>} : memref<1x8x16x64xf32, #tpu.memory_space<vmem>>, vector<1x1x16x64xf32>,
    %29 = vector.extract_strided_slice %8 {offsets = [0, 128], sizes = [16, 64], strides = [1, 1]} : vector<16x256xf32> to vector<16x64xf32>
    %c0_21 = arith.constant 0 : index
    %c6 = arith.constant 6 : index
    %c0_22 = arith.constant 0 : index
    %c0_23 = arith.constant 0 : index
    %30 = vector.load %arg4[%c0_21, %c6, %c0_22, %c0_23] : memref<1x8x16x64xf32, #tpu.memory_space<vmem>>, vector<1x1x16x64xf32>
    %31 = vector.shape_cast %30 : vector<1x1x16x64xf32> to vector<16x64xf32>
    %32 = vector.shape_cast %29 : vector<16x64xf32> to vector<1x1x16x64xf32>
    tpu.vector_store %arg4[%c0_21, %c6, %c0_22, %c0_23], %32 {strides = array<i32>} : memref<1x8x16x64xf32, #tpu.memory_space<vmem>>, vector<1x1x16x64xf32>,
    %33 = vector.extract_strided_slice %7 {offsets = [0, 192], sizes = [16, 64], strides = [1, 1]} : vector<16x256xf32> to vector<16x64xf32>
    %c0_24 = arith.constant 0 : index
    %c3 = arith.constant 3 : index
    %c0_25 = arith.constant 0 : index
    %c0_26 = arith.constant 0 : index
    %34 = vector.load %arg4[%c0_24, %c3, %c0_25, %c0_26] : memref<1x8x16x64xf32, #tpu.memory_space<vmem>>, vector<1x1x16x64xf32>
    %35 = vector.shape_cast %34 : vector<1x1x16x64xf32> to vector<16x64xf32>
    %36 = vector.shape_cast %33 : vector<16x64xf32> to vector<1x1x16x64xf32>
    tpu.vector_store %arg4[%c0_24, %c3, %c0_25, %c0_26], %36 {strides = array<i32>} : memref<1x8x16x64xf32, #tpu.memory_space<vmem>>, vector<1x1x16x64xf32>,
    %37 = vector.extract_strided_slice %8 {offsets = [0, 192], sizes = [16, 64], strides = [1, 1]} : vector<16x256xf32> to vector<16x64xf32>
    %c0_27 = arith.constant 0 : index
    %c7 = arith.constant 7 : index
    %c0_28 = arith.constant 0 : index
    %c0_29 = arith.constant 0 : index
    %38 = vector.load %arg4[%c0_27, %c7, %c0_28, %c0_29] : memref<1x8x16x64xf32, #tpu.memory_space<vmem>>, vector<1x1x16x64xf32>
    %39 = vector.shape_cast %38 : vector<1x1x16x64xf32> to vector<16x64xf32>
    %40 = vector.shape_cast %37 : vector<16x64xf32> to vector<1x1x16x64xf32>
    tpu.vector_store %arg4[%c0_27, %c7, %c0_28, %c0_29], %40 {strides = array<i32>} : memref<1x8x16x64xf32, #tpu.memory_space<vmem>>, vector<1x1x16x64xf32>,
    return
  }
  func.func @transform_0(%arg0: i32, %arg1: i32) -> (i32, i32, i32) {
    %c0_i32 = arith.constant 0 : i32
    %c0_i32_0 = arith.constant 0 : i32
    return %arg0, %arg1, %c0_i32 : i32, i32, i32
  }
  func.func @transform_1(%arg0: i32, %arg1: i32) -> (i32, i32) {
    %c0_i32 = arith.constant 0 : i32
    %c0_i32_0 = arith.constant 0 : i32
    %c0_i32_1 = arith.constant 0 : i32
    return %c0_i32, %c0_i32_0 : i32, i32
  }
  func.func @transform_2(%arg0: i32, %arg1: i32) -> (i32, i32, i32, i32) {
    %c0_i32 = arith.constant 0 : i32
    %c0_i32_0 = arith.constant 0 : i32
    %c0_i32_1 = arith.constant 0 : i32
    return %arg0, %c0_i32, %arg1, %c0_i32_0 : i32, i32, i32, i32
  }
}

</mosaic_0001>

<llo_original>
// kernel: tpu_custom_call.1
$region0: #{tpu_custom_call.1}
  #allocation0 [shape = 'u32[]', space=smem, size = 0x4, offset = 0x4, fixed_abs, tag = 'smem constant byte address 0x4 - core index']
  #allocation1 [shape = 'u32[144,128]{1,0:T(1,128)}', space=vmem, size = 0x12000, scoped, tag = 'internal scratch']
  %s0 = inlined_call_operand.hbm [shape: f32[2,16,512], index: 0, kind: input, shape index: {}]
  %s1 = inlined_call_operand.hbm [shape: f32[256,256], index: 1, kind: input, shape index: {}]
  %s2 = inlined_call_operand.hbm [shape: f32[2,8,16,64], index: 2, kind: output, shape index: {}]
  %s3 = sld [smem:[#allocation0]]
  $region49: #{tpu_custom_call.1} parent=0
    _
  %s5 = ssub.s32 1, %s3
  %s6 = scalar_select 0, %s5, %s3
  $region1: #{tpu_custom_call.1} parent=0
    #allocation2 [shape = 'u8[65536]{0}', space=vmem, size = 0x10000, scoped, tag = 'input window, operand 0']
    #allocation3 [shape = 's32[2]{0}', space=sflag, size = 0x8, scoped, tag = 'scoped memory for tpu_custom_call.1']
    #allocation4 [shape = 's32[2]{0}', space=sflag, size = 0x8, scoped, tag = 'scoped memory for tpu_custom_call.1']
    #allocation5 [shape = 'u8[262144]{0}', space=vmem, size = 0x40000, scoped, tag = 'input window, operand 1, single buffered']
    #allocation6 [shape = 's32[1]{0}', space=sflag, size = 0x4, scoped, tag = 'scoped memory for tpu_custom_call.1']
    #allocation7 [shape = 'u8[131072]{0}', space=vmem, size = 0x20000, scoped, tag = 'output window, operand 0']
    %7 = vsyncpa [#allocation3], 0
    %s8 = scalar_lea.sflag [#allocation3], 1
    %9 = vsyncpa %s8, 0
    %10 = vsyncpa [#allocation6], 0
    %11 = vsyncpa [#allocation4], 0
    %s12 = scalar_lea.sflag [#allocation4], 1
    %13 = vsyncpa %s12, 0
    loop: start=0, step=1, limit=4
    $region2: #{tpu_custom_call.1} parent=1 // loop_pre_header
      _
    $region3: #{tpu_custom_call.1} parent=1 // loop_header
      %s15 = sphi 0, %s19
      %p16 = scmp.ge.s32.totalorder %s15, 4
      %s22 = sphi 0, %s34
      %s23 = sphi 0, %s30
      %s24 = sphi 0, %s22
      %s25 = sphi 0, %s23
      %s26 = sphi 0, %s24
      %s27 = sphi 0, %s25
      %s39 = sphi 0, %s41
      %s42 = sphi 0, %s39
      %s43 = sphi 0, %s42
      %s59 = sphi 0, %s43
      %s63 = sphi 0, %s63
      %s65 = sphi 0, %s63
      %s66 = sphi 0, %s65
      %s80 = sphi 0, %s66
      %s88 = sphi 0, %s90
      %s91 = sphi 0, %s88
      %s92 = sphi 0, %s91
      %s108 = sphi 0, %s92
    $region4: #{tpu_custom_call.1} parent=1 // loop_header_branch
      %18 = sbr.rel (%p16) target = $region8
    $region5: #{tpu_custom_call.1} parent=1 // loop_body
      %s20 = ssub.s32 %s15, 1
      %s21 = ssub.s32 %s15, 2
      %s28 = sadd.s32 1, %s23
      %p29 = scmp.ge.s32.totalorder %s28, 1
      %s30 = scalar_select %p29, 0, %s28
      %s31 = sadd.s32 1, %s22
      %s32 = scalar_select %p29, %s31, %s22
      %p33 = scmp.ge.s32.totalorder %s32, 2
      %s34 = scalar_select %p33, 0, %s32
      %s35 = ssub.s32 %s22, %s34
      %s36 = ssub.s32 %s23, %s30
      %s37 = sor.u32 %s35, %s36
      %p38 = scmp.eq.s32.totalorder %s37, 0
      %s40 = sadd.s32 %s39, 1
      %s41 = scalar_select %p38, %s39, %s40
      %p44 = pneg %p38
      %p45 = scmp.eq.s32.totalorder %s15, 1
      %p46 = por %p44, %p45
      %p47 = scmp.ne.s32.totalorder %s39, %s42
      %p48 = scmp.eq.s32.totalorder %s15, 0
      %p49 = por %p47, %p48
      %p50 = scmp.ne.s32.totalorder %s39, %s42
      %p51 = scmp.eq.s32.totalorder %s20, 1
      %p52 = por %p50, %p51
      %p53 = scmp.ne.s32.totalorder %s42, %s43
      %p54 = scmp.eq.s32.totalorder %s20, 0
      %p55 = por %p53, %p54
      %p56 = scmp.ne.s32.totalorder %s42, %s43
      %p57 = scmp.eq.s32.totalorder %s21, 1
      %p58 = por %p56, %p57
      %p60 = scmp.ne.s32.totalorder %s43, %s59
      %p61 = scmp.eq.s32.totalorder %s21, 0
      %p62 = por %p60, %p61
      %s64 = sadd.s32 %s63, 1
      %p67 = scmp.eq.s32.totalorder %s15, 1
      %p68 = scmp.ne.s32.totalorder %s63, %s65
      %p69 = scmp.eq.s32.totalorder %s15, 0
      %p70 = por %p68, %p69
      %p71 = scmp.ne.s32.totalorder %s63, %s65
      %p72 = scmp.eq.s32.totalorder %s20, 1
      %p73 = por %p71, %p72
      %p74 = scmp.ne.s32.totalorder %s65, %s66
      %p75 = scmp.eq.s32.totalorder %s20, 0
      %p76 = por %p74, %p75
      %p77 = scmp.ne.s32.totalorder %s65, %s66
      %p78 = scmp.eq.s32.totalorder %s21, 1
      %p79 = por %p77, %p78
      %p81 = scmp.ne.s32.totalorder %s66, %s80
      %p82 = scmp.eq.s32.totalorder %s21, 0
      %p83 = por %p81, %p82
      %s84 = ssub.s32 %s22, %s34
      %s85 = ssub.s32 %s23, %s30
      %s86 = sor.u32 %s84, %s85
      %p87 = scmp.eq.s32.totalorder %s86, 0
      %s89 = sadd.s32 %s88, 1
      %s90 = scalar_select %p87, %s88, %s89
      %p93 = pneg %p87
      %p94 = scmp.eq.s32.totalorder %s15, 1
      %p95 = por %p93, %p94
      %p96 = scmp.ne.s32.totalorder %s88, %s91
      %p97 = scmp.eq.s32.totalorder %s15, 0
      %p98 = por %p96, %p97
      %p99 = scmp.ne.s32.totalorder %s88, %s91
      %p100 = scmp.eq.s32.totalorder %s20, 1
      %p101 = por %p99, %p100
      %p102 = scmp.ne.s32.totalorder %s91, %s92
      %p103 = scmp.eq.s32.totalorder %s20, 0
      %p104 = por %p102, %p103
      %p105 = scmp.ne.s32.totalorder %s91, %s92
      %p106 = scmp.eq.s32.totalorder %s21, 1
      %p107 = por %p105, %p106
      %p109 = scmp.ne.s32.totalorder %s92, %s108
      %p110 = scmp.eq.s32.totalorder %s21, 0
      %p111 = por %p109, %p110
      %p112 = scmp.le.s32.totalorder 1, %s15
      %p113 = scmp.lt.s32.totalorder %s15, 3
      %p114 = pnand %p112, %p113
      %p115 = pneg %p114
      // Predicated region
      $region9: #{tpu_custom_call.1} parent=5 // pred_check
        _
      $region10: #{tpu_custom_call.1} parent=5 // pred_check_branch
        %117 = sbr.rel (%p114) target = $region12
      $region11: #{tpu_custom_call.1} parent=5 // pred_region
        %s118 = ssub.s32 %s15, 1
        // Predicated region
        $region13: #{tpu_custom_call.1} parent=11 // pred_check
          %p119 = pneg %p76
        $region14: #{tpu_custom_call.1} parent=11 // pred_check_branch
          %121 = sbr.rel (%p119) target = $region16
        $region15: #{tpu_custom_call.1} parent=11 // pred_region
          %s123 = ssub.s32 8192, 8192
          %124 = vsyncadd [#allocation6], %s123
          %s125 = sshll.u32 [#allocation5], 4
          %s126 = int_to_ptr.vmem [resolvable:$true] %s125
          %131 = dma.hbm_to_vmem [thread:$0]  %s1, 8192, %s126, [#allocation6], 256, 256, 16
        $region16: #{tpu_custom_call.1} parent=11 // pred_fallthru
          _
      $region12: #{tpu_custom_call.1} parent=5 // pred_fallthru
        _
      %p132 = scmp.lt.s32.totalorder %s15, 2
      // Predicated region
      $region17: #{tpu_custom_call.1} parent=5 // pred_check
        %p133 = pneg %p132
      $region18: #{tpu_custom_call.1} parent=5 // pred_check_branch
        %135 = sbr.rel (%p133) target = $region20
      $region19: #{tpu_custom_call.1} parent=5 // pred_region
        // Predicated region
        $region21: #{tpu_custom_call.1} parent=19 // pred_check
          %p136 = pneg %p49
        $region22: #{tpu_custom_call.1} parent=19 // pred_check_branch
          %138 = sbr.rel (%p136) target = $region24
        $region23: #{tpu_custom_call.1} parent=19 // pred_region
          %s139 = sand.u32 %s39, 1
          %s140 = scalar_lea.sflag [#allocation3], %s139
          %s141 = sand.u32 %s39, 1
          %s142 = smul.addr %s141, 64
          %s143 = scalar_lea.vmem [#allocation2], %s142
          %s144 = smul.u32 2, %s23
          %s146 = ssub.s32 1024, 1024
          %147 = vsyncadd %s140, %s146
          %s148 = smul.addr %s144, 4
          %s149 = smul.addr %s22, 8
          %s150 = sadd.s32 %s148, %s149
          %s151 = smul.addr %s150, 128
          %s152 = scalar_lea.hbm %s0, %s151
          %s153 = sshll.u32 %s143, 4
          %s154 = int_to_ptr.vmem [resolvable:$true] %s153
          %159 = dma.hbm_to_vmem [thread:$0]  %s152, 1024, %s154, %s140, 512, 512, 32
        $region24: #{tpu_custom_call.1} parent=19 // pred_fallthru
          _
      $region20: #{tpu_custom_call.1} parent=5 // pred_fallthru
        _
      %p160 = scmp.le.s32.totalorder 1, %s15
      %p161 = scmp.lt.s32.totalorder %s15, 3
      %p162 = pnand %p160, %p161
      %p163 = pneg %p162
      // Predicated region
      $region25: #{tpu_custom_call.1} parent=5 // pred_check
        _
      $region26: #{tpu_custom_call.1} parent=5 // pred_check_branch
        %165 = sbr.rel (%p162) target = $region28
      $region27: #{tpu_custom_call.1} parent=5 // pred_region
        %s166 = ssub.s32 %s15, 1
        %s167 = sand.u32 %s42, 1
        %s168 = scalar_lea.sflag [#allocation3], %s167
        %s169 = sand.u32 %s42, 1
        %s170 = smul.addr %s169, 64
        %s171 = scalar_lea.vmem [#allocation2], %s170
        // Predicated region
        $region29: #{tpu_custom_call.1} parent=27 // pred_check
          %p172 = pneg %p55
        $region30: #{tpu_custom_call.1} parent=27 // pred_check_branch
          %174 = sbr.rel (%p172) target = $region32
        $region31: #{tpu_custom_call.1} parent=27 // pred_region
          %175 = dma.done %s168, 1024
        $region32: #{tpu_custom_call.1} parent=27 // pred_fallthru
          _
        // Predicated region
        $region33: #{tpu_custom_call.1} parent=27 // pred_check
          %p176 = pneg %p76
        $region34: #{tpu_custom_call.1} parent=27 // pred_check_branch
          %178 = sbr.rel (%p176) target = $region36
        $region35: #{tpu_custom_call.1} parent=27 // pred_region
          %179 = dma.done [#allocation6], 8192
        $region36: #{tpu_custom_call.1} parent=27 // pred_fallthru
          _
        %s180 = sand.u32 %s42, 1
        %s181 = scalar_lea.sflag [#allocation3], %s180
        %s182 = sand.u32 %s42, 1
        %s183 = smul.addr %s182, 64
        %s184 = scalar_lea.vmem [#allocation2], %s183
        %p185 = pneg %p55
        %p186 = pneg %p52
        %p187 = pneg %p76
        %p188 = pneg %p73
        %p189 = pneg %p104
        %p190 = pneg %p101
        %s191 = sand.u32 %s91, 1
        %s192 = scalar_lea.sflag [#allocation4], %s191
        %s193 = sand.u32 %s91, 1
        %s194 = smul.addr %s193, 128
        %s195 = scalar_lea.vmem [#allocation7], %s194
        %s196 = smul.u32 2, %s25
        %s197 = smul.u32 2, %s25
        %v198 = vld [vmem:[%s171] sm:$0xff]
        %v199 = vld [vmem:[%s171 + $0x8] sm:$0xff]
        %v200 = vld [vmem:[%s171 + $0x10] sm:$0xff]
        %v201 = vld [vmem:[%s171 + $0x18] sm:$0xff]
        %v202 = vld [vmem:[%s171 + $0x20] sm:$0xff]
        %v203 = vld [vmem:[%s171 + $0x28] sm:$0xff]
        %v204 = vld [vmem:[%s171 + $0x30] sm:$0xff]
        %v205 = vld [vmem:[%s171 + $0x38] sm:$0xff]
        %v206 = vadd.f32 %v198, %v200
        %v207 = vadd.f32 %v199, %v201
        %v208 = vadd.f32 %v202, %v204
        %v209 = vadd.f32 %v203, %v205
        %v210 = vsub.f32 %v198, %v200
        %v211 = vsub.f32 %v199, %v201
        %v212 = vsub.f32 %v202, %v204
        %v213 = vsub.f32 %v203, %v205
        %v214 = vld [vmem:[#allocation5] sm:$0xff]
        %v215 = vld [vmem:[#allocation5 + $0x8] sm:$0xff]
        %v216 = vld [vmem:[#allocation5 + $0x10] sm:$0xff]
        %v217 = vld [vmem:[#allocation5 + $0x18] sm:$0xff]
        %v218 = vld [vmem:[#allocation5 + $0x20] sm:$0xff]
        %v219 = vld [vmem:[#allocation5 + $0x28] sm:$0xff]
        %v220 = vld [vmem:[#allocation5 + $0x30] sm:$0xff]
        %v221 = vld [vmem:[#allocation5 + $0x38] sm:$0xff]
        %v222 = vld [vmem:[#allocation5 + $0x40] sm:$0xff]
        %v223 = vld [vmem:[#allocation5 + $0x48] sm:$0xff]
        %v224 = vld [vmem:[#allocation5 + $0x50] sm:$0xff]
        %v225 = vld [vmem:[#allocation5 + $0x58] sm:$0xff]
        %v226 = vld [vmem:[#allocation5 + $0x60] sm:$0xff]
        %v227 = vld [vmem:[#allocation5 + $0x68] sm:$0xff]
        %v228 = vld [vmem:[#allocation5 + $0x70] sm:$0xff]
        %v229 = vld [vmem:[#allocation5 + $0x78] sm:$0xff]
        %v230 = vld [vmem:[#allocation5 + $0x80] sm:$0xff]
        %v231 = vld [vmem:[#allocation5 + $0x88] sm:$0xff]
        %v232 = vld [vmem:[#allocation5 + $0x90] sm:$0xff]
        %v233 = vld [vmem:[#allocation5 + $0x98] sm:$0xff]
        %v234 = vld [vmem:[#allocation5 + $0xa0] sm:$0xff]
        %v235 = vld [vmem:[#allocation5 + $0xa8] sm:$0xff]
        %v236 = vld [vmem:[#allocation5 + $0xb0] sm:$0xff]
        %v237 = vld [vmem:[#allocation5 + $0xb8] sm:$0xff]
        %v238 = vld [vmem:[#allocation5 + $0xc0] sm:$0xff]
        %v239 = vld [vmem:[#allocation5 + $0xc8] sm:$0xff]
        %v240 = vld [vmem:[#allocation5 + $0xd0] sm:$0xff]
        %v241 = vld [vmem:[#allocation5 + $0xd8] sm:$0xff]
        %v242 = vld [vmem:[#allocation5 + $0xe0] sm:$0xff]
        %v243 = vld [vmem:[#allocation5 + $0xe8] sm:$0xff]
        %v244 = vld [vmem:[#allocation5 + $0xf0] sm:$0xff]
        %v245 = vld [vmem:[#allocation5 + $0xf8] sm:$0xff]
        %v246 = vld [vmem:[#allocation5 + $0x100] sm:$0xff]
        %v247 = vld [vmem:[#allocation5 + $0x108] sm:$0xff]
        %v248 = vld [vmem:[#allocation5 + $0x110] sm:$0xff]
        %v249 = vld [vmem:[#allocation5 + $0x118] sm:$0xff]
        %v250 = vld [vmem:[#allocation5 + $0x120] sm:$0xff]
        %v251 = vld [vmem:[#allocation5 + $0x128] sm:$0xff]
        %v252 = vld [vmem:[#allocation5 + $0x130] sm:$0xff]
        %v253 = vld [vmem:[#allocation5 + $0x138] sm:$0xff]
        %v254 = vld [vmem:[#allocation5 + $0x140] sm:$0xff]
        %v255 = vld [vmem:[#allocation5 + $0x148] sm:$0xff]
        %v256 = vld [vmem:[#allocation5 + $0x150] sm:$0xff]
        %v257 = vld [vmem:[#allocation5 + $0x158] sm:$0xff]
        %v258 = vld [vmem:[#allocation5 + $0x160] sm:$0xff]
        %v259 = vld [vmem:[#allocation5 + $0x168] sm:$0xff]
        %v260 = vld [vmem:[#allocation5 + $0x170] sm:$0xff]
        %v261 = vld [vmem:[#allocation5 + $0x178] sm:$0xff]
        %v262 = vld [vmem:[#allocation5 + $0x180] sm:$0xff]
        %v263 = vld [vmem:[#allocation5 + $0x188] sm:$0xff]
        %v264 = vld [vmem:[#allocation5 + $0x190] sm:$0xff]
        %v265 = vld [vmem:[#allocation5 + $0x198] sm:$0xff]
        %v266 = vld [vmem:[#allocation5 + $0x1a0] sm:$0xff]
        %v267 = vld [vmem:[#allocation5 + $0x1a8] sm:$0xff]
        %v268 = vld [vmem:[#allocation5 + $0x1b0] sm:$0xff]
        %v269 = vld [vmem:[#allocation5 + $0x1b8] sm:$0xff]
        %v270 = vld [vmem:[#allocation5 + $0x1c0] sm:$0xff]
        %v271 = vld [vmem:[#allocation5 + $0x1c8] sm:$0xff]
        %v272 = vld [vmem:[#allocation5 + $0x1d0] sm:$0xff]
        %v273 = vld [vmem:[#allocation5 + $0x1d8] sm:$0xff]
        %v274 = vld [vmem:[#allocation5 + $0x1e0] sm:$0xff]
        %v275 = vld [vmem:[#allocation5 + $0x1e8] sm:$0xff]
        %v276 = vld [vmem:[#allocation5 + $0x1f0] sm:$0xff]
        %v277 = vld [vmem:[#allocation5 + $0x1f8] sm:$0xff]
        %278 = vmatprep.subr.mxu0 %v215
        %279 = vmatpush1.msra.mxu0 %v214
        %280 = vmatprep.subr.mxu0 %v217
        %281 = vmatpush1.msra.mxu0 %v216
        %282 = vmatprep.subr.mxu0 %v219
        %283 = vmatpush1.msra.mxu0 %v218
        %284 = vmatprep.subr.mxu0 %v221
        %285 = vmatpush1.msra.mxu0 %v220
        %286 = vmatprep.subr.mxu0 %v223
        %287 = vmatpush1.msra.mxu0 %v222
        %288 = vmatprep.subr.mxu0 %v225
        %289 = vmatpush1.msra.mxu0 %v224
        %290 = vmatprep.subr.mxu0 %v227
        %291 = vmatpush1.msra.mxu0 %v226
        %292 = vmatprep.subr.mxu0 %v229
        %293 = vmatpush1.msra.mxu0 %v228
        %294 = vmatprep.subr.mxu0 %v231
        %295 = vmatpush1.msra.mxu0 %v230
        %296 = vmatprep.subr.mxu0 %v233
        %297 = vmatpush1.msra.mxu0 %v232
        %298 = vmatprep.subr.mxu0 %v235
        %299 = vmatpush1.msra.mxu0 %v234
        %300 = vmatprep.subr.mxu0 %v237
        %301 = vmatpush1.msra.mxu0 %v236
        %302 = vmatprep.subr.mxu0 %v239
        %303 = vmatpush1.msra.mxu0 %v238
        %304 = vmatprep.subr.mxu0 %v241
        %305 = vmatpush1.msra.mxu0 %v240
        %306 = vmatprep.subr.mxu0 %v243
        %307 = vmatpush1.msra.mxu0 %v242
        %308 = vmatprep.subr.mxu0 %v245
        %309 = vmatpush1.msra.mxu0 %v244
        %310 = vmatprep.subr.mxu0 %v247
        %311 = vmatpush1.msra.mxu0 %v246
        %312 = vmatprep.subr.mxu0 %v249
        %313 = vmatpush1.msra.mxu0 %v248
        %314 = vmatprep.subr.mxu0 %v251
        %315 = vmatpush1.msra.mxu0 %v250
        %316 = vmatprep.subr.mxu0 %v253
        %317 = vmatpush1.msra.mxu0 %v252
        %318 = vmatprep.subr.mxu0 %v255
        %319 = vmatpush1.msra.mxu0 %v254
        %320 = vmatprep.subr.mxu0 %v257
        %321 = vmatpush1.msra.mxu0 %v256
        %322 = vmatprep.subr.mxu0 %v259
        %323 = vmatpush1.msra.mxu0 %v258
        %324 = vmatprep.subr.mxu0 %v261
        %325 = vmatpush1.msra.mxu0 %v260
        %326 = vmatprep.subr.mxu0 %v263
        %327 = vmatpush1.msra.mxu0 %v262
        %328 = vmatprep.subr.mxu0 %v265
        %329 = vmatpush1.msra.mxu0 %v264
        %330 = vmatprep.subr.mxu0 %v267
        %331 = vmatpush1.msra.mxu0 %v266
        %332 = vmatprep.subr.mxu0 %v269
        %333 = vmatpush1.msra.mxu0 %v268
        %334 = vmatprep.subr.mxu0 %v271
        %335 = vmatpush1.msra.mxu0 %v270
        %336 = vmatprep.subr.mxu0 %v273
        %337 = vmatpush1.msra.mxu0 %v272
        %338 = vmatprep.subr.mxu0 %v275
        %339 = vmatpush1.msra.mxu0 %v274
        %340 = vmatprep.subr.mxu0 %v277
        %341 = vmatpush1.msra.mxu0 %v276
        %342 = vmatprep.mubr.f32.mxu0 %v207
        %343 = vmatmul.mubr.f32.gmra.mrb[0].mxu0 %v206
        %v344 = vpop.f32.mrb[0].mxu0
        %v345 = vadd.f32 0.0, %v344
        %v346 = vpop.f32.mrb[0].mxu0
        %v347 = vadd.f32 0.0, %v346
        %348 = vmatprep.mubr.f32.mxu0 %v209
        %349 = vmatmul.mubr.f32.gmra.mrb[0].mxu0 %v208
        %v350 = vpop.f32.mrb[0].mxu0
        %v351 = vadd.f32 0.0, %v350
        %v352 = vpop.f32.mrb[0].mxu0
        %v353 = vadd.f32 0.0, %v352
        %354 = vdwg.mxu0
        %355 = vmatprep.subr.mxu0 %v215
        %356 = vmatpush1.msra.mxu0 %v214
        %357 = vmatprep.subr.mxu0 %v217
        %358 = vmatpush1.msra.mxu0 %v216
        %359 = vmatprep.subr.mxu0 %v219
        %360 = vmatpush1.msra.mxu0 %v218
        %361 = vmatprep.subr.mxu0 %v221
        %362 = vmatpush1.msra.mxu0 %v220
        %363 = vmatprep.subr.mxu0 %v223
        %364 = vmatpush1.msra.mxu0 %v222
        %365 = vmatprep.subr.mxu0 %v225
        %366 = vmatpush1.msra.mxu0 %v224
        %367 = vmatprep.subr.mxu0 %v227
        %368 = vmatpush1.msra.mxu0 %v226
        %369 = vmatprep.subr.mxu0 %v229
        %370 = vmatpush1.msra.mxu0 %v228
        %371 = vmatprep.subr.mxu0 %v231
        %372 = vmatpush1.msra.mxu0 %v230
        %373 = vmatprep.subr.mxu0 %v233
        %374 = vmatpush1.msra.mxu0 %v232
        %375 = vmatprep.subr.mxu0 %v235
        %376 = vmatpush1.msra.mxu0 %v234
        %377 = vmatprep.subr.mxu0 %v237
        %378 = vmatpush1.msra.mxu0 %v236
        %379 = vmatprep.subr.mxu0 %v239
        %380 = vmatpush1.msra.mxu0 %v238
        %381 = vmatprep.subr.mxu0 %v241
        %382 = vmatpush1.msra.mxu0 %v240
        %383 = vmatprep.subr.mxu0 %v243
        %384 = vmatpush1.msra.mxu0 %v242
        %385 = vmatprep.subr.mxu0 %v245
        %386 = vmatpush1.msra.mxu0 %v244
        %387 = vmatprep.subr.mxu0 %v247
        %388 = vmatpush1.msra.mxu0 %v246
        %389 = vmatprep.subr.mxu0 %v249
        %390 = vmatpush1.msra.mxu0 %v248
        %391 = vmatprep.subr.mxu0 %v251
        %392 = vmatpush1.msra.mxu0 %v250
        %393 = vmatprep.subr.mxu0 %v253
        %394 = vmatpush1.msra.mxu0 %v252
        %395 = vmatprep.subr.mxu0 %v255
        %396 = vmatpush1.msra.mxu0 %v254
        %397 = vmatprep.subr.mxu0 %v257
        %398 = vmatpush1.msra.mxu0 %v256
        %399 = vmatprep.subr.mxu0 %v259
        %400 = vmatpush1.msra.mxu0 %v258
        %401 = vmatprep.subr.mxu0 %v261
        %402 = vmatpush1.msra.mxu0 %v260
        %403 = vmatprep.subr.mxu0 %v263
        %404 = vmatpush1.msra.mxu0 %v262
        %405 = vmatprep.subr.mxu0 %v265
        %406 = vmatpush1.msra.mxu0 %v264
        %407 = vmatprep.subr.mxu0 %v267
        %408 = vmatpush1.msra.mxu0 %v266
        %409 = vmatprep.subr.mxu0 %v269
        %410 = vmatpush1.msra.mxu0 %v268
        %411 = vmatprep.subr.mxu0 %v271
        %412 = vmatpush1.msra.mxu0 %v270
        %413 = vmatprep.subr.mxu0 %v273
        %414 = vmatpush1.msra.mxu0 %v272
        %415 = vmatprep.subr.mxu0 %v275
        %416 = vmatpush1.msra.mxu0 %v274
        %417 = vmatprep.subr.mxu0 %v277
        %418 = vmatpush1.msra.mxu0 %v276
        %419 = vmatprep.mubr.f32.mxu0 %v211
        %420 = vmatmul.mubr.f32.gmra.mrb[0].mxu0 %v210
        %v421 = vpop.f32.mrb[0].mxu0
        %v422 = vadd.f32 0.0, %v421
        %v423 = vpop.f32.mrb[0].mxu0
        %v424 = vadd.f32 0.0, %v423
        %425 = vmatprep.mubr.f32.mxu0 %v213
        %426 = vmatmul.mubr.f32.gmra.mrb[0].mxu0 %v212
        %v427 = vpop.f32.mrb[0].mxu0
        %v428 = vadd.f32 0.0, %v427
        %v429 = vpop.f32.mrb[0].mxu0
        %v430 = vadd.f32 0.0, %v429
        %431 = vdwg.mxu0
        %vm432 = vcmask 523264
        %433 = vst.msk [vmem:[%s195] sm:$0xff] %vm432, %v345
        %434 = vst.msk [vmem:[%s195 + $0x8] sm:$0xff] %vm432, %v351
        %s435 = scalar_lea.vmem %s195, 64 [#allocation7]
        %436 = vst.msk [vmem:[%s435] sm:$0xff] %vm432, %v422
        %437 = vst.msk [vmem:[%s435 + $0x8] sm:$0xff] %vm432, %v428
        %440 = vrot.lane.b32.xlu0 %v345, 64
        %v441 = vpop.permute.xlu0 %440
        %442 = vrot.lane.b32.xlu0 %v351, 64
        %v443 = vpop.permute.xlu0 %442
        %s446 = scalar_lea.vmem %s195, 16 [#allocation7]
        %447 = vst.msk [vmem:[%s446] sm:$0xff] %vm432, %v441
        %448 = vst.msk [vmem:[%s446 + $0x8] sm:$0xff] %vm432, %v443
        %451 = vrot.lane.b32.xlu0 %v422, 64
        %v452 = vpop.permute.xlu0 %451
        %453 = vrot.lane.b32.xlu0 %v428, 64
        %v454 = vpop.permute.xlu0 %453
        %s457 = scalar_lea.vmem %s195, 80 [#allocation7]
        %458 = vst.msk [vmem:[%s457] sm:$0xff] %vm432, %v452
        %459 = vst.msk [vmem:[%s457 + $0x8] sm:$0xff] %vm432, %v454
        %s460 = scalar_lea.vmem %s195, 32 [#allocation7]
        %461 = vst.msk [vmem:[%s460] sm:$0xff] %vm432, %v347
        %462 = vst.msk [vmem:[%s460 + $0x8] sm:$0xff] %vm432, %v353
        %s463 = scalar_lea.vmem %s195, 96 [#allocation7]
        %464 = vst.msk [vmem:[%s463] sm:$0xff] %vm432, %v424
        %465 = vst.msk [vmem:[%s463 + $0x8] sm:$0xff] %vm432, %v430
        %468 = vrot.lane.b32.xlu0 %v347, 64
        %v469 = vpop.permute.xlu0 %468
        %470 = vrot.lane.b32.xlu0 %v353, 64
        %v471 = vpop.permute.xlu0 %470
        %s474 = scalar_lea.vmem %s195, 48 [#allocation7]
        %475 = vst.msk [vmem:[%s474] sm:$0xff] %vm432, %v469
        %476 = vst.msk [vmem:[%s474 + $0x8] sm:$0xff] %vm432, %v471
        %479 = vrot.lane.b32.xlu0 %v424, 64
        %v480 = vpop.permute.xlu0 %479
        %481 = vrot.lane.b32.xlu0 %v430, 64
        %v482 = vpop.permute.xlu0 %481
        %s485 = scalar_lea.vmem %s195, 112 [#allocation7]
        %486 = vst.msk [vmem:[%s485] sm:$0xff] %vm432, %v480
        %487 = vst.msk [vmem:[%s485 + $0x8] sm:$0xff] %vm432, %v482
        %s488 = sand.u32 %s91, 1
        %s489 = scalar_lea.sflag [#allocation4], %s488
        %s490 = sand.u32 %s91, 1
        %s491 = smul.addr %s490, 128
        %s492 = scalar_lea.vmem [#allocation7], %s491
        // Predicated region
        $region37: #{tpu_custom_call.1} parent=27 // pred_check
          %p493 = pneg %p101
        $region38: #{tpu_custom_call.1} parent=27 // pred_check_branch
          %495 = sbr.rel (%p493) target = $region40
        $region39: #{tpu_custom_call.1} parent=27 // pred_region
          %s496 = smul.u32 2, %s25
          %s498 = ssub.s32 2048, 2048
          %499 = vsyncadd %s489, %s498
          %s500 = smul.addr %s24, 16
          %s501 = sadd.s32 %s496, %s500
          %s502 = smul.addr %s501, 128
          %s503 = scalar_lea.hbm %s2, %s502
          %s504 = sshll.u32 %s492, 4
          %s505 = int_to_ptr.vmem [resolvable:$true] %s504
          %510 = dma.vmem_to_hbm [thread:$0]  %s505, 2048, %s503, %s489, 128, 128, 8
        $region40: #{tpu_custom_call.1} parent=27 // pred_fallthru
          _
      $region28: #{tpu_custom_call.1} parent=5 // pred_fallthru
        _
      %p511 = scmp.le.s32.totalorder 2, %s15
      // Predicated region
      $region41: #{tpu_custom_call.1} parent=5 // pred_check
        %p512 = pneg %p511
      $region42: #{tpu_custom_call.1} parent=5 // pred_check_branch
        %514 = sbr.rel (%p512) target = $region44
      $region43: #{tpu_custom_call.1} parent=5 // pred_region
        %s515 = ssub.s32 %s15, 2
        // Predicated region
        $region45: #{tpu_custom_call.1} parent=43 // pred_check
          %p516 = pneg %p107
        $region46: #{tpu_custom_call.1} parent=43 // pred_check_branch
          %518 = sbr.rel (%p516) target = $region48
        $region47: #{tpu_custom_call.1} parent=43 // pred_region
          %s519 = sand.u32 %s92, 1
          %s520 = scalar_lea.sflag [#allocation4], %s519
          %s521 = sand.u32 %s92, 1
          %s522 = smul.addr %s521, 128
          %s523 = scalar_lea.vmem [#allocation7], %s522
          %524 = dma.done %s520, 2048
        $region48: #{tpu_custom_call.1} parent=43 // pred_fallthru
          _
      $region44: #{tpu_custom_call.1} parent=5 // pred_fallthru
        _
    $region6: #{tpu_custom_call.1} parent=1 // loop_footer
      %s19 = sadd.s32 1, %s15
    $region7: #{tpu_custom_call.1} parent=1 // loop_footer_branch
      %14 = sbr.rel target = $region3
    $region8: #{tpu_custom_call.1} parent=1 // loop_exit
      _
    %525 = vsyncpa [#allocation3], 1
    %s526 = scalar_lea.sflag [#allocation3], 1
    %527 = vsyncpa %s526, 1
    %528 = vsyncpa [#allocation6], 1
    %529 = vsyncpa [#allocation4], 1
    %s530 = scalar_lea.sflag [#allocation4], 1
    %531 = vsyncpa %s530, 1

</llo_original>
